<compile_context>
chip_gen: v7x
topology: tpu7x:2x2x1
jax: 0.10.0
libtpu: 0.0.40
codegen_flags: <defaults>
</compile_context>

<pallas_src>
import math

import jax
import jax.numpy as jnp
from jax.experimental import pallas as pl
from jax.experimental.pallas import tpu as pltpu

IN_DIM = 2 * 14 * 14   # 392, fixed by the module
LATENT_DIM = 64
N_TARGETS = 2
OUT_PAD = 128          # lane-dense padded output width (multiple of 128)


def _round_up(x, m):
    return (x + m - 1) // m * m


def mlp_kernel(x_ref, w1_ref, b1_ref, w2_ref, b2_ref, w3_ref, b3_ref, o_ref):
    # x tile arrives f32 straight from HBM; cast to bf16 here (VPU slack) so the
    # MXU runs bf16 x bf16 with f32 accumulation.
    x = x_ref[...].astype(jnp.bfloat16)
    h1 = jnp.dot(x, w1_ref[...], preferred_element_type=jnp.float32) + b1_ref[...]
    h1 = jnp.maximum(h1, 0.0).astype(jnp.bfloat16)
    h2 = jnp.dot(h1, w2_ref[...], preferred_element_type=jnp.float32) + b2_ref[...]
    h2 = jnp.maximum(h2, 0.0).astype(jnp.bfloat16)
    out = jnp.dot(h2, w3_ref[...], preferred_element_type=jnp.float32) + b3_ref[...]
    o_ref[...] = out.astype(o_ref.dtype)   # bf16 lane-dense store


def mlp_forward(x_nchw, params, *, tile_b=2048):
    """params are f32 (as initialized); weights are cast to bf16 here (tiny)."""
    w1, b1, w2, b2, w3, b3 = params
    B = x_nchw.shape[0]

    # Flatten exactly like torch's x.view(B, 2*14*14) (row-major over C,H,W).
    # No dtype cast, no padding: the kernel reads f32 directly.
    x2d = x_nchw.reshape(B, IN_DIM)

    # Batch tile: multiple of 8 (sublane), capped so large batches always give
    # >= 2 grid steps (lets the parallel axis split across v7x's 2 TensorCores).
    tb = min(tile_b, max(8, _round_up(pl.cdiv(B, 2), 8)))
    grid = (pl.cdiv(B, tb),)

    # Weights to bf16 (halves their — tiny — HBM stream); biases stay f32.
    w1_bf = w1.astype(jnp.bfloat16)
    w2_bf = w2.astype(jnp.bfloat16)
    # Pad fc3 to a lane-dense 128-wide output (extra columns are exact zeros).
    w3_pad = jnp.zeros((LATENT_DIM, OUT_PAD), jnp.bfloat16).at[:, :N_TARGETS].set(
        w3.astype(jnp.bfloat16))
    b3_pad = jnp.zeros((1, OUT_PAD), jnp.float32).at[:, :N_TARGETS].set(b3)

    def pinned(shape):
        # Whole-array block with a constant index_map: fetched once, reused
        # for every batch tile.
        return pl.BlockSpec(shape, lambda i: (0, 0))

    flops = 2 * B * (IN_DIM * LATENT_DIM
                     + LATENT_DIM * LATENT_DIM
                     + LATENT_DIM * OUT_PAD)
    bytes_accessed = (
        B * IN_DIM * 4                                                # x (f32)
        + (IN_DIM * LATENT_DIM + LATENT_DIM * LATENT_DIM
           + LATENT_DIM * OUT_PAD) * 2                                # weights (bf16)
        + (2 * LATENT_DIM + OUT_PAD) * 4                              # biases (f32)
        + B * OUT_PAD * 2)                                            # output (bf16)

    out_pad = pl.pallas_call(
        mlp_kernel,
        out_shape=jax.ShapeDtypeStruct((B, OUT_PAD), jnp.bfloat16),
        grid=grid,
        in_specs=[
            pl.BlockSpec((tb, IN_DIM), lambda i: (i, 0)),   # streamed f32 x tile
            pinned((IN_DIM, LATENT_DIM)),                   # w1
            pinned((1, LATENT_DIM)),                        # b1
            pinned((LATENT_DIM, LATENT_DIM)),               # w2
            pinned((1, LATENT_DIM)),                        # b2
            pinned((LATENT_DIM, OUT_PAD)),                  # w3 (padded)
            pinned((1, OUT_PAD)),                           # b3 (padded)
        ],
        out_specs=pl.BlockSpec((tb, OUT_PAD), lambda i: (i, 0)),
        compiler_params=pltpu.CompilerParams(
            dimension_semantics=("parallel",),
            # double-buffered (tb, 392) f32 x tile (lane-padded to 512) + bf16
            # out tiles + ~60 KB weights: ~10 MiB at tb=2048; 32 MiB is safe on
            # every generation (v7x physical VMEM is 64 MiB per TC).
            vmem_limit_bytes=32 * 1024 * 1024),
        cost_estimate=pl.CostEstimate(
            flops=flops, transcendentals=0, bytes_accessed=bytes_accessed),
    )(x2d, w1_bf, b1, w2_bf, b2, w3_pad, b3_pad)

    # Drop the zero-padded output columns; return f32 like the torch module.
    return out_pad[:B, :N_TARGETS].astype(jnp.float32)


def xavier_uniform(key, fan_in, fan_out):
    # Matches torch.nn.init.xavier_uniform_ (gain=1): U(-a, a), a=sqrt(6/(fi+fo)).
    a = math.sqrt(6.0 / (fan_in + fan_out))
    # Stored as (in, out) so the kernel computes x @ W (== torch's x @ W.T).
    return jax.random.uniform(key, (fan_in, fan_out), jnp.float32, minval=-a, maxval=a)


def init_params(key):
    k1, k2, k3 = jax.random.split(key, 3)
    w1 = xavier_uniform(k1, IN_DIM, LATENT_DIM)
    b1 = jnp.zeros((1, LATENT_DIM), jnp.float32)
    w2 = xavier_uniform(k2, LATENT_DIM, LATENT_DIM)
    b2 = jnp.zeros((1, LATENT_DIM), jnp.float32)
    w3 = xavier_uniform(k3, LATENT_DIM, N_TARGETS)
    b3 = jnp.zeros((1, N_TARGETS), jnp.float32)
    return (w1, b1, w2, b2, w3, b3)


def mlp_ref(x_nchw, params):
    # Pure-JAX f32 reference for correctness checking.
    w1, b1, w2, b2, w3, b3 = params
    x = x_nchw.reshape(x_nchw.shape[0], IN_DIM)
    h1 = jnp.maximum(x @ w1 + b1, 0.0)
    h2 = jnp.maximum(h1 @ w2 + b2, 0.0)
    return h2 @ w3 + b3


if __name__ == "__main__":
    key = jax.random.PRNGKey(0)
    kx, kp = jax.random.split(key)

    # Small deterministic input consistent with the module: (B, 2, 14, 14).
    x = jax.random.normal(kx, (2, 2, 14, 14), jnp.float32)
    params = init_params(kp)

    out = mlp_forward(x, params)
    out = jax.block_until_ready(out)

    ref = mlp_ref(x, params)
    assert out.shape == (2, N_TARGETS), out.shape
    # bf16 weights/activations with f32 MXU accumulation + bf16 output store
    # -> loosened tolerance vs the f32 reference.
    assert jnp.allclose(out, ref, atol=5e-2, rtol=5e-2), "mismatch vs reference"

    print("KERNEL_OK")
</pallas_src>

<mosaic_0001>
module attributes {stable_mosaic.version = 11 : i64} {
  func.func @mlp_kernel(%arg0: i32, %arg1: memref<8x392xf32, #tpu.memory_space<vmem>>, %arg2: memref<392x64xbf16, #tpu.memory_space<vmem>>, %arg3: memref<1x64xf32, #tpu.memory_space<vmem>>, %arg4: memref<64x64xbf16, #tpu.memory_space<vmem>>, %arg5: memref<1x64xf32, #tpu.memory_space<vmem>>, %arg6: memref<64x128xbf16, #tpu.memory_space<vmem>>, %arg7: memref<1x128xf32, #tpu.memory_space<vmem>>, %arg8: memref<8x128xbf16, #tpu.memory_space<vmem>>) attributes {dimension_semantics = [#tpu.dimension_semantics<parallel>], iteration_bounds = array<i64: 1>, scalar_prefetch = 0 : i64, scratch_operands = 0 : i64, tpu.core_type = #tpu.core_type<tc>, window_params = [{transform_indices = @transform_0, window_bounds = array<i64: 8, 392>}, {pipeline_mode = #tpu.pipeline_mode<synchronous>, transform_indices = @transform_1, window_bounds = array<i64: 392, 64>}, {pipeline_mode = #tpu.pipeline_mode<synchronous>, transform_indices = @transform_2, window_bounds = array<i64: 1, 64>}, {pipeline_mode = #tpu.pipeline_mode<synchronous>, transform_indices = @transform_3, window_bounds = array<i64: 64, 64>}, {pipeline_mode = #tpu.pipeline_mode<synchronous>, transform_indices = @transform_4, window_bounds = array<i64: 1, 64>}, {pipeline_mode = #tpu.pipeline_mode<synchronous>, transform_indices = @transform_5, window_bounds = array<i64: 64, 128>}, {pipeline_mode = #tpu.pipeline_mode<synchronous>, transform_indices = @transform_6, window_bounds = array<i64: 1, 128>}, {transform_indices = @transform_7, window_bounds = array<i64: 8, 128>}]} {
    %c0 = arith.constant 0 : index
    %c0_0 = arith.constant 0 : index
    %0 = vector.load %arg1[%c0, %c0_0] : memref<8x392xf32, #tpu.memory_space<vmem>>, vector<8x392xf32>
    %1 = arith.truncf %0 : vector<8x392xf32> to vector<8x392xbf16>
    %c0_1 = arith.constant 0 : index
    %c0_2 = arith.constant 0 : index
    %2 = vector.load %arg2[%c0_1, %c0_2] : memref<392x64xbf16, #tpu.memory_space<vmem>>, vector<392x64xbf16>
    %cst = arith.constant dense<0.000000e+00> : vector<8x64xf32>
    %3 = tpu.matmul %1, %2, %cst {dimension_numbers = #tpu.dot_dimension_numbers<[1], [0], [0], [1], [0, 0, 1, 1], [], []>} : vector<8x392xbf16>, vector<392x64xbf16>, vector<8x64xf32> -> vector<8x64xf32>
    %c0_3 = arith.constant 0 : index
    %c0_4 = arith.constant 0 : index
    %4 = vector.load %arg3[%c0_3, %c0_4] : memref<1x64xf32, #tpu.memory_space<vmem>>, vector<1x64xf32>
    %5 = vector.broadcast %4 : vector<1x64xf32> to vector<8x64xf32>
    %6 = arith.addf %3, %5 : vector<8x64xf32>
    %cst_5 = arith.constant 0.000000e+00 : f32
    %7 = vector.broadcast %cst_5 : f32 to vector<8x64xf32>
    %8 = arith.maximumf %6, %7 : vector<8x64xf32>
    %9 = arith.truncf %8 : vector<8x64xf32> to vector<8x64xbf16>
    %c0_6 = arith.constant 0 : index
    %c0_7 = arith.constant 0 : index
    %10 = vector.load %arg4[%c0_6, %c0_7] : memref<64x64xbf16, #tpu.memory_space<vmem>>, vector<64x64xbf16>
    %cst_8 = arith.constant dense<0.000000e+00> : vector<8x64xf32>
    %11 = tpu.matmul %9, %10, %cst_8 {dimension_numbers = #tpu.dot_dimension_numbers<[1], [0], [0], [1], [0, 0, 1, 1], [], []>} : vector<8x64xbf16>, vector<64x64xbf16>, vector<8x64xf32> -> vector<8x64xf32>
    %c0_9 = arith.constant 0 : index
    %c0_10 = arith.constant 0 : index
    %12 = vector.load %arg5[%c0_9, %c0_10] : memref<1x64xf32, #tpu.memory_space<vmem>>, vector<1x64xf32>
    %13 = vector.broadcast %12 : vector<1x64xf32> to vector<8x64xf32>
    %14 = arith.addf %11, %13 : vector<8x64xf32>
    %cst_11 = arith.constant 0.000000e+00 : f32
    %15 = vector.broadcast %cst_11 : f32 to vector<8x64xf32>
    %16 = arith.maximumf %14, %15 : vector<8x64xf32>
    %17 = arith.truncf %16 : vector<8x64xf32> to vector<8x64xbf16>
    %c0_12 = arith.constant 0 : index
    %c0_13 = arith.constant 0 : index
    %18 = vector.load %arg6[%c0_12, %c0_13] : memref<64x128xbf16, #tpu.memory_space<vmem>>, vector<64x128xbf16>
    %cst_14 = arith.constant dense<0.000000e+00> : vector<8x128xf32>
    %19 = tpu.matmul %17, %18, %cst_14 {dimension_numbers = #tpu.dot_dimension_numbers<[1], [0], [0], [1], [0, 0, 1, 1], [], []>} : vector<8x64xbf16>, vector<64x128xbf16>, vector<8x128xf32> -> vector<8x128xf32>
    %c0_15 = arith.constant 0 : index
    %c0_16 = arith.constant 0 : index
    %20 = vector.load %arg7[%c0_15, %c0_16] : memref<1x128xf32, #tpu.memory_space<vmem>>, vector<1x128xf32>
    %21 = vector.broadcast %20 : vector<1x128xf32> to vector<8x128xf32>
    %22 = arith.addf %19, %21 : vector<8x128xf32>
    %23 = arith.truncf %22 : vector<8x128xf32> to vector<8x128xbf16>
    %c0_17 = arith.constant 0 : index
    %c0_18 = arith.constant 0 : index
    %24 = vector.load %arg8[%c0_17, %c0_18] : memref<8x128xbf16, #tpu.memory_space<vmem>>, vector<8x128xbf16>
    tpu.vector_store %arg8[%c0_17, %c0_18], %23 {strides = array<i32>} : memref<8x128xbf16, #tpu.memory_space<vmem>>, vector<8x128xbf16>,
    return
  }
  func.func @transform_0(%arg0: i32) -> (i32, i32) {
    %c0_i32 = arith.constant 0 : i32
    %c0_i32_0 = arith.constant 0 : i32
    return %arg0, %c0_i32 : i32, i32
  }
  func.func @transform_1(%arg0: i32) -> (i32, i32) {
    %c0_i32 = arith.constant 0 : i32
    %c0_i32_0 = arith.constant 0 : i32
    %c0_i32_1 = arith.constant 0 : i32
    return %c0_i32, %c0_i32_0 : i32, i32
  }
  func.func @transform_2(%arg0: i32) -> (i32, i32) {
    %c0_i32 = arith.constant 0 : i32
    %c0_i32_0 = arith.constant 0 : i32
    %c0_i32_1 = arith.constant 0 : i32
    return %c0_i32, %c0_i32_0 : i32, i32
  }
  func.func @transform_3(%arg0: i32) -> (i32, i32) {
    %c0_i32 = arith.constant 0 : i32
    %c0_i32_0 = arith.constant 0 : i32
    %c0_i32_1 = arith.constant 0 : i32
    return %c0_i32, %c0_i32_0 : i32, i32
  }
  func.func @transform_4(%arg0: i32) -> (i32, i32) {
    %c0_i32 = arith.constant 0 : i32
    %c0_i32_0 = arith.constant 0 : i32
    %c0_i32_1 = arith.constant 0 : i32
    return %c0_i32, %c0_i32_0 : i32, i32
  }
  func.func @transform_5(%arg0: i32) -> (i32, i32) {
    %c0_i32 = arith.constant 0 : i32
    %c0_i32_0 = arith.constant 0 : i32
    %c0_i32_1 = arith.constant 0 : i32
    return %c0_i32, %c0_i32_0 : i32, i32
  }
  func.func @transform_6(%arg0: i32) -> (i32, i32) {
    %c0_i32 = arith.constant 0 : i32
    %c0_i32_0 = arith.constant 0 : i32
    %c0_i32_1 = arith.constant 0 : i32
    return %c0_i32, %c0_i32_0 : i32, i32
  }
  func.func @transform_7(%arg0: i32) -> (i32, i32) {
    %c0_i32 = arith.constant 0 : i32
    %c0_i32_0 = arith.constant 0 : i32
    return %arg0, %c0_i32 : i32, i32
  }
}

</mosaic_0001>

<llo_original>
// kernel: tpu_custom_call.1
$region0: #{tpu_custom_call.1}
  #allocation0 [shape = 'u32[]', space=smem, size = 0x4, offset = 0x4, fixed_abs, tag = 'smem constant byte address 0x4 - core index']
  #allocation1 [shape = 'u32[144,128]{1,0:T(1,128)}', space=vmem, size = 0x12000, scoped, tag = 'internal scratch']
  %s0 = inlined_call_operand.vmem [shape: f32[2,392], index: 0, kind: input, shape index: {}]
  %s1 = inlined_call_operand.vmem [shape: bf16[392,64], index: 1, kind: input, shape index: {}]
  %s2 = inlined_call_operand.vmem [shape: f32[1,64], index: 2, kind: input, shape index: {}]
  %s3 = inlined_call_operand.vmem [shape: bf16[64,64], index: 3, kind: input, shape index: {}]
  %s4 = inlined_call_operand.vmem [shape: f32[1,64], index: 4, kind: input, shape index: {}]
  %s5 = inlined_call_operand.vmem [shape: bf16[64,128], index: 5, kind: input, shape index: {}]
  %s6 = inlined_call_operand.vmem [shape: f32[1,128], index: 6, kind: input, shape index: {}]
  %s7 = inlined_call_operand.hbm [shape: bf16[2,128], index: 7, kind: output, shape index: {}]
  %s8 = sld [smem:[#allocation0]]
  $region38: #{tpu_custom_call.1} parent=0
    _
  %s10 = ssub.s32 1, %s8
  %s11 = scalar_select 0, %s10, %s8
  $region1: #{tpu_custom_call.1} parent=0
    #allocation2 [shape = 'u8[2048]{0}', space=vmem, size = 0x800, scoped, tag = 'output window, operand 0, single buffered']
    #allocation3 [shape = 's32[1]{0}', space=sflag, size = 0x4, scoped, tag = 'scoped memory for tpu_custom_call.1']
    %12 = vsyncpa [#allocation3], 0
    // Predicated region
    $region2: #{tpu_custom_call.1} parent=1 // pred_check
      _
    $region3: #{tpu_custom_call.1} parent=1 // pred_check_branch
      %14 = sbr.rel (0) target = $region5
    $region4: #{tpu_custom_call.1} parent=1 // pred_region
      _
    $region5: #{tpu_custom_call.1} parent=1 // pred_fallthru
      _
    // Predicated region
    $region6: #{tpu_custom_call.1} parent=1 // pred_check
      _
    $region7: #{tpu_custom_call.1} parent=1 // pred_check_branch
      %16 = sbr.rel (0) target = $region9
    $region8: #{tpu_custom_call.1} parent=1 // pred_region
      _
    $region9: #{tpu_custom_call.1} parent=1 // pred_fallthru
      _
    // Predicated region
    $region10: #{tpu_custom_call.1} parent=1 // pred_check
      _
    $region11: #{tpu_custom_call.1} parent=1 // pred_check_branch
      %18 = sbr.rel (0) target = $region13
    $region12: #{tpu_custom_call.1} parent=1 // pred_region
      _
    $region13: #{tpu_custom_call.1} parent=1 // pred_fallthru
      _
    // Predicated region
    $region14: #{tpu_custom_call.1} parent=1 // pred_check
      _
    $region15: #{tpu_custom_call.1} parent=1 // pred_check_branch
      %20 = sbr.rel (0) target = $region17
    $region16: #{tpu_custom_call.1} parent=1 // pred_region
      _
    $region17: #{tpu_custom_call.1} parent=1 // pred_fallthru
      _
    // Predicated region
    $region18: #{tpu_custom_call.1} parent=1 // pred_check
      _
    $region19: #{tpu_custom_call.1} parent=1 // pred_check_branch
      %22 = sbr.rel (0) target = $region21
    $region20: #{tpu_custom_call.1} parent=1 // pred_region
      _
    $region21: #{tpu_custom_call.1} parent=1 // pred_fallthru
      _
    // Predicated region
    $region22: #{tpu_custom_call.1} parent=1 // pred_check
      _
    $region23: #{tpu_custom_call.1} parent=1 // pred_check_branch
      %24 = sbr.rel (0) target = $region25
    $region24: #{tpu_custom_call.1} parent=1 // pred_region
      _
    $region25: #{tpu_custom_call.1} parent=1 // pred_fallthru
      _
    // Predicated region
    $region26: #{tpu_custom_call.1} parent=1 // pred_check
      _
    $region27: #{tpu_custom_call.1} parent=1 // pred_check_branch
      %26 = sbr.rel (0) target = $region29
    $region28: #{tpu_custom_call.1} parent=1 // pred_region
      _
    $region29: #{tpu_custom_call.1} parent=1 // pred_fallthru
      _
    %v28 = vld [vmem:[%s0] sm:$0xff]
    %v29 = vld [vmem:[%s0 + $0x8] sm:$0xff]
    %v30 = vld [vmem:[%s0 + $0x10] sm:$0xff]
    %v31 = vld [vmem:[%s0 + $0x18] sm:$0xff]
    %v36 = vcombine.low %v28, %v29
    %v37 = vcombine.high %v28, %v29
    %v38 = vcombine.low %v30, %v31
    %v39 = vcombine.high %v30, %v31
    %v41 = vunpack.c.l.s4 1983009808
    %v42 = vunpack.c.0.s8 %v41
    %v43 = vlaneseq
    %v44 = vshrl.u32 %v43, 7
    %v45 = vsub.s32 %v42, %v44
    %v46 = vrot.slane %v36, %v45
    %v48 = vunpack.c.l.s4 1983009808
    %v49 = vunpack.c.0.s8 %v48
    %v50 = vlaneseq
    %v51 = vshrl.u32 %v50, 7
    %v52 = vsub.s32 %v49, %v51
    %v53 = vrot.slane %v37, %v52
    %v55 = vunpack.c.l.s4 1983009808
    %v56 = vunpack.c.0.s8 %v55
    %v57 = vlaneseq
    %v58 = vshrl.u32 %v57, 7
    %v59 = vsub.s32 %v56, %v58
    %v60 = vrot.slane %v38, %v59
    %v62 = vunpack.c.l.s4 1983009808
    %v63 = vunpack.c.0.s8 %v62
    %v64 = vlaneseq
    %v65 = vshrl.u32 %v64, 7
    %v66 = vsub.s32 %v63, %v65
    %v67 = vrot.slane %v39, %v66
    %v68 = vcombine.low %v46, %v60
    %v69 = vcombine.high %v46, %v60
    %v70 = vcombine.low %v53, %v67
    %v71 = vcombine.high %v53, %v67
    %v76 = vpack.c.bf16 %v68, %v68
    %v77 = vpack.c.bf16 %v69, %v69
    %v78 = vpack.c.bf16 %v70, %v70
    %v79 = vpack.c.bf16 %v71, %v71
    %v80 = vld [vmem:[%s1] sm:$0xf]
    %v81 = vld [vmem:[%s1 + $0x4] sm:$0xf]
    %v82 = vld [vmem:[%s1 + $0x8] sm:$0xf]
    %v83 = vld [vmem:[%s1 + $0xc] sm:$0xf]
    %v84 = vld [vmem:[%s1 + $0x10] sm:$0xf]
    %v85 = vld [vmem:[%s1 + $0x14] sm:$0xf]
    %v86 = vld [vmem:[%s1 + $0x18] sm:$0xf]
    %v87 = vld [vmem:[%s1 + $0x1c] sm:$0xf]
    %v88 = vld [vmem:[%s1 + $0x20] sm:$0xf]
    %v89 = vld [vmem:[%s1 + $0x24] sm:$0xf]
    %v90 = vld [vmem:[%s1 + $0x28] sm:$0xf]
    %v91 = vld [vmem:[%s1 + $0x2c] sm:$0xf]
    %v92 = vld [vmem:[%s1 + $0x30] sm:$0xf]
    %v93 = vld [vmem:[%s1 + $0x34] sm:$0xf]
    %v94 = vld [vmem:[%s1 + $0x38] sm:$0xf]
    %v95 = vld [vmem:[%s1 + $0x3c] sm:$0xf]
    %v96 = vld [vmem:[%s1 + $0x40] sm:$0xf]
    %v97 = vld [vmem:[%s1 + $0x44] sm:$0xf]
    %v98 = vld [vmem:[%s1 + $0x48] sm:$0xf]
    %v99 = vld [vmem:[%s1 + $0x4c] sm:$0xf]
    %v100 = vld [vmem:[%s1 + $0x50] sm:$0xf]
    %v101 = vld [vmem:[%s1 + $0x54] sm:$0xf]
    %v102 = vld [vmem:[%s1 + $0x58] sm:$0xf]
    %v103 = vld [vmem:[%s1 + $0x5c] sm:$0xf]
    %v104 = vld [vmem:[%s1 + $0x60] sm:$0xf]
    %v105 = vld [vmem:[%s1 + $0x64] sm:$0xf]
    %v106 = vld [vmem:[%s1 + $0x68] sm:$0xf]
    %v107 = vld [vmem:[%s1 + $0x6c] sm:$0xf]
    %v108 = vld [vmem:[%s1 + $0x70] sm:$0xf]
    %v109 = vld [vmem:[%s1 + $0x74] sm:$0xf]
    %v110 = vld [vmem:[%s1 + $0x78] sm:$0xf]
    %v111 = vld [vmem:[%s1 + $0x7c] sm:$0xf]
    %v112 = vld [vmem:[%s1 + $0x80] sm:$0xf]
    %v113 = vld [vmem:[%s1 + $0x84] sm:$0xf]
    %v114 = vld [vmem:[%s1 + $0x88] sm:$0xf]
    %v115 = vld [vmem:[%s1 + $0x8c] sm:$0xf]
    %v116 = vld [vmem:[%s1 + $0x90] sm:$0xf]
    %v117 = vld [vmem:[%s1 + $0x94] sm:$0xf]
    %v118 = vld [vmem:[%s1 + $0x98] sm:$0xf]
    %v119 = vld [vmem:[%s1 + $0x9c] sm:$0xf]
    %v120 = vld [vmem:[%s1 + $0xa0] sm:$0xf]
    %v121 = vld [vmem:[%s1 + $0xa4] sm:$0xf]
    %v122 = vld [vmem:[%s1 + $0xa8] sm:$0xf]
    %v123 = vld [vmem:[%s1 + $0xac] sm:$0xf]
    %v124 = vld [vmem:[%s1 + $0xb0] sm:$0xf]
    %v125 = vld [vmem:[%s1 + $0xb4] sm:$0xf]
    %v126 = vld [vmem:[%s1 + $0xb8] sm:$0xf]
    %v127 = vld [vmem:[%s1 + $0xbc] sm:$0xf]
    %v128 = vld [vmem:[%s1 + $0xc0] sm:$0xf]
    %v129 = vld [vmem:[%s2] sm:$0x1]
    %v131 = vlaneseq
    %v132 = vshrl.u32 %v131, 7
    %v133 = vsub.s32 0, %v132
    %v134 = vrot.slane %v129, %v133
    %v185 = vunpack.c.l.b16 %v80
    %v186 = vunpack.c.l.b16 %v81
    %v187 = vunpack.c.l.b16 %v82
    %v188 = vunpack.c.l.b16 %v83
    %v189 = vunpack.c.l.b16 %v84
    %v190 = vunpack.c.l.b16 %v85
    %v191 = vunpack.c.l.b16 %v86
    %v192 = vunpack.c.l.b16 %v87
    %v193 = vunpack.c.l.b16 %v88
    %v194 = vunpack.c.l.b16 %v89
    %v195 = vunpack.c.l.b16 %v90
    %v196 = vunpack.c.l.b16 %v91
    %v197 = vunpack.c.l.b16 %v92
    %v198 = vunpack.c.l.b16 %v93
    %v199 = vunpack.c.l.b16 %v94
    %v200 = vunpack.c.l.b16 %v95
    %v201 = vunpack.c.l.b16 %v96
    %v202 = vunpack.c.l.b16 %v97
    %v203 = vunpack.c.l.b16 %v98
    %v204 = vunpack.c.l.b16 %v99
    %v205 = vunpack.c.l.b16 %v100
    %v206 = vunpack.c.l.b16 %v101
    %v207 = vunpack.c.l.b16 %v102
    %v208 = vunpack.c.l.b16 %v103
    %v209 = vunpack.c.l.b16 %v104
    %v210 = vunpack.c.l.b16 %v105
    %v211 = vunpack.c.l.b16 %v106
    %v212 = vunpack.c.l.b16 %v107
    %v213 = vunpack.c.l.b16 %v108
    %v214 = vunpack.c.l.b16 %v109
    %v215 = vunpack.c.l.b16 %v110
    %v216 = vunpack.c.l.b16 %v111
    %v217 = vunpack.c.l.b16 %v112
    %v218 = vunpack.c.l.b16 %v113
    %v219 = vunpack.c.l.b16 %v114
    %v220 = vunpack.c.l.b16 %v115
    %v221 = vunpack.c.l.b16 %v116
    %v222 = vunpack.c.l.b16 %v117
    %v223 = vunpack.c.l.b16 %v118
    %v224 = vunpack.c.l.b16 %v119
    %v225 = vunpack.c.l.b16 %v120
    %v226 = vunpack.c.l.b16 %v121
    %v227 = vunpack.c.l.b16 %v122
    %v228 = vunpack.c.l.b16 %v123
    %v229 = vunpack.c.l.b16 %v124
    %v230 = vunpack.c.l.b16 %v125
    %v231 = vunpack.c.l.b16 %v126
    %v232 = vunpack.c.l.b16 %v127
    %v233 = vunpack.c.l.b16 %v128
    %v234 = vpack.c.b16 %v186, %v185
    %v235 = vpack.c.b16 %v188, %v187
    %v236 = vpack.c.b16 %v190, %v189
    %v237 = vpack.c.b16 %v192, %v191
    %v238 = vpack.c.b16 %v194, %v193
    %v239 = vpack.c.b16 %v196, %v195
    %v240 = vpack.c.b16 %v198, %v197
    %v241 = vpack.c.b16 %v200, %v199
    %v242 = vpack.c.b16 %v202, %v201
    %v243 = vpack.c.b16 %v204, %v203
    %v244 = vpack.c.b16 %v206, %v205
    %v245 = vpack.c.b16 %v208, %v207
    %v246 = vpack.c.b16 %v210, %v209
    %v247 = vpack.c.b16 %v212, %v211
    %v248 = vpack.c.b16 %v214, %v213
    %v249 = vpack.c.b16 %v216, %v215
    %v250 = vpack.c.b16 %v218, %v217
    %v251 = vpack.c.b16 %v220, %v219
    %v252 = vpack.c.b16 %v222, %v221
    %v253 = vpack.c.b16 %v224, %v223
    %v254 = vpack.c.b16 %v226, %v225
    %v255 = vpack.c.b16 %v228, %v227
    %v256 = vpack.c.b16 %v230, %v229
    %v257 = vpack.c.b16 %v232, %v231
    %v258 = vpack.c.b16 %v233, %v233
    %vm283 = vcmask 64512
    %v285 = vsel %vm283, %v79, 0
    %vm287 = vcmask 1043456
    %v289 = vsel %vm287, %v258, 0
    %291 = vmatprep.subr.bf16.mxu0 0
    %292 = vmatpush1.bf16.msra.mxu0 %v234
    %293 = vmatprep.subr.bf16.mxu0 0
    %294 = vmatpush1.bf16.msra.mxu0 %v235
    %295 = vmatprep.subr.bf16.mxu0 0
    %296 = vmatpush1.bf16.msra.mxu0 %v236
    %297 = vmatprep.subr.bf16.mxu0 0
    %298 = vmatpush1.bf16.msra.mxu0 %v237
    %299 = vmatprep.subr.bf16.mxu0 0
    %300 = vmatpush1.bf16.msra.mxu0 %v238
    %301 = vmatprep.subr.bf16.mxu0 0
    %302 = vmatpush1.bf16.msra.mxu0 %v239
    %303 = vmatprep.subr.bf16.mxu0 0
    %304 = vmatpush1.bf16.msra.mxu0 %v240
    %305 = vmatprep.subr.bf16.mxu0 0
    %306 = vmatpush1.bf16.msra.mxu0 %v241
    %307 = vmatprep.subr.bf16.mxu0 0
    %308 = vmatpush1.bf16.msra.mxu0 %v242
    %309 = vmatprep.subr.bf16.mxu0 0
    %310 = vmatpush1.bf16.msra.mxu0 %v243
    %311 = vmatprep.subr.bf16.mxu0 0
    %312 = vmatpush1.bf16.msra.mxu0 %v244
    %313 = vmatprep.subr.bf16.mxu0 0
    %314 = vmatpush1.bf16.msra.mxu0 %v245
    %315 = vmatprep.subr.bf16.mxu0 0
    %316 = vmatpush1.bf16.msra.mxu0 %v246
    %317 = vmatprep.subr.bf16.mxu0 0
    %318 = vmatpush1.bf16.msra.mxu0 %v247
    %319 = vmatprep.subr.bf16.mxu0 0
    %320 = vmatpush1.bf16.msra.mxu0 %v248
    %321 = vmatprep.subr.bf16.mxu0 0
    %322 = vmatpush1.bf16.msra.mxu0 %v249
    %323 = vmatprep.mubr.bf16.mxu0 %v77
    %324 = vmatmul.mubr.bf16.gmra.mrb[0].mxu0 %v76
    %v325 = vpop.f32.mrb[0].mxu0
    %v326 = vadd.f32 %v134, %v325
    %v327 = vpop.f32.mrb[0].mxu0
    %v328 = vpop.f32.mrb[0].mxu0
    %v329 = vpop.f32.mrb[0].mxu0
    %330 = vdwg.mxu0
    %331 = vmatprep.subr.bf16.mxu0 0
    %332 = vmatpush1.bf16.msra.mxu0 %v250
    %333 = vmatprep.subr.bf16.mxu0 0
    %334 = vmatpush1.bf16.msra.mxu0 %v251
    %335 = vmatprep.subr.bf16.mxu0 0
    %336 = vmatpush1.bf16.msra.mxu0 %v252
    %337 = vmatprep.subr.bf16.mxu0 0
    %338 = vmatpush1.bf16.msra.mxu0 %v253
    %339 = vmatprep.subr.bf16.mxu0 0
    %340 = vmatpush1.bf16.msra.mxu0 %v254
    %341 = vmatprep.subr.bf16.mxu0 0
    %342 = vmatpush1.bf16.msra.mxu0 %v255
    %343 = vmatprep.subr.bf16.mxu0 0
    %344 = vmatpush1.bf16.msra.mxu0 %v256
    %345 = vmatprep.subr.bf16.mxu0 0
    %346 = vmatpush1.bf16.msra.mxu0 %v257
    %347 = vmatprep.subr.bf16.mxu0 0
    %348 = vmatpush1.bf16.msra.mxu0 %v289
    %349 = vmatprep.subr.bf16.mxu0 0
    %350 = vmatpush1.bf16.msra.mxu0 0
    %351 = vmatprep.subr.bf16.mxu0 0
    %352 = vmatpush1.bf16.msra.mxu0 0
    %353 = vmatprep.subr.bf16.mxu0 0
    %354 = vmatpush1.bf16.msra.mxu0 0
    %355 = vmatprep.subr.bf16.mxu0 0
    %356 = vmatpush1.bf16.msra.mxu0 0
    %357 = vmatprep.subr.bf16.mxu0 0
    %358 = vmatpush1.bf16.msra.mxu0 0
    %359 = vmatprep.subr.bf16.mxu0 0
    %360 = vmatpush1.bf16.msra.mxu0 0
    %361 = vmatprep.subr.bf16.mxu0 0
    %362 = vmatpush1.bf16.msra.mxu0 0
    %363 = vmatprep.mubr.bf16.mxu0 %v285
    %364 = vmatmul.mubr.bf16.gmra.mrb[0].mxu0 %v78
    %v365 = vpop.f32.mrb[0].mxu0
    %v366 = vadd.f32 %v326, %v365
    %v367 = vpop.f32.mrb[0].mxu0
    %v368 = vpop.f32.mrb[0].mxu0
    %v369 = vpop.f32.mrb[0].mxu0
    %370 = vdwg.mxu0
    %v371 = vmax.f32 %v366, 0.0
    %v372 = vpack.c.bf16 %v371, %v371
    %v373 = vld [vmem:[%s3] sm:$0xf]
    %v374 = vld [vmem:[%s3 + $0x4] sm:$0xf]
    %v375 = vld [vmem:[%s3 + $0x8] sm:$0xf]
    %v376 = vld [vmem:[%s3 + $0xc] sm:$0xf]
    %v377 = vld [vmem:[%s3 + $0x10] sm:$0xf]
    %v378 = vld [vmem:[%s3 + $0x14] sm:$0xf]
    %v379 = vld [vmem:[%s3 + $0x18] sm:$0xf]
    %v380 = vld [vmem:[%s3 + $0x1c] sm:$0xf]
    %v381 = vld [vmem:[%s4] sm:$0x1]
    %v383 = vlaneseq
    %v384 = vshrl.u32 %v383, 7
    %v385 = vsub.s32 0, %v384
    %v386 = vrot.slane %v381, %v385
    %v396 = vunpack.c.l.b16 %v373
    %v397 = vunpack.c.l.b16 %v374
    %v398 = vunpack.c.l.b16 %v375
    %v399 = vunpack.c.l.b16 %v376
    %v400 = vunpack.c.l.b16 %v377
    %v401 = vunpack.c.l.b16 %v378
    %v402 = vunpack.c.l.b16 %v379
    %v403 = vunpack.c.l.b16 %v380
    %v404 = vpack.c.b16 %v397, %v396
    %v405 = vpack.c.b16 %v399, %v398
    %v406 = vpack.c.b16 %v401, %v400
    %v407 = vpack.c.b16 %v403, %v402
    %vm412 = vcmask 523264
    %v414 = vsel %vm412, %v372, 0
    %416 = vmatprep.subr.bf16.mxu0 0
    %417 = vmatpush1.bf16.msra.mxu0 %v404
    %418 = vmatprep.subr.bf16.mxu0 0
    %419 = vmatpush1.bf16.msra.mxu0 %v405
    %420 = vmatprep.subr.bf16.mxu0 0
    %421 = vmatpush1.bf16.msra.mxu0 %v406
    %422 = vmatprep.subr.bf16.mxu0 0
    %423 = vmatpush1.bf16.msra.mxu0 %v407
    %424 = vmatprep.subr.bf16.mxu0 0
    %425 = vmatpush1.bf16.msra.mxu0 0
    %426 = vmatprep.subr.bf16.mxu0 0
    %427 = vmatpush1.bf16.msra.mxu0 0
    %428 = vmatprep.subr.bf16.mxu0 0
    %429 = vmatpush1.bf16.msra.mxu0 0
    %430 = vmatprep.subr.bf16.mxu0 0
    %431 = vmatpush1.bf16.msra.mxu0 0
    %432 = vmatprep.subr.bf16.mxu0 0
    %433 = vmatpush1.bf16.msra.mxu0 0
    %434 = vmatprep.subr.bf16.mxu0 0
    %435 = vmatpush1.bf16.msra.mxu0 0
    %436 = vmatprep.subr.bf16.mxu0 0
    %437 = vmatpush1.bf16.msra.mxu0 0
    %438 = vmatprep.subr.bf16.mxu0 0
    %439 = vmatpush1.bf16.msra.mxu0 0
    %440 = vmatprep.subr.bf16.mxu0 0
    %441 = vmatpush1.bf16.msra.mxu0 0
    %442 = vmatprep.subr.bf16.mxu0 0
    %443 = vmatpush1.bf16.msra.mxu0 0
    %444 = vmatprep.subr.bf16.mxu0 0
    %445 = vmatpush1.bf16.msra.mxu0 0
    %446 = vmatprep.subr.bf16.mxu0 0
    %447 = vmatpush1.bf16.msra.mxu0 0
    %448 = vmatprep.mubr.bf16.mxu0 0
    %449 = vmatmul.mubr.bf16.gmra.mrb[0].mxu0 %v414
    %v450 = vpop.f32.mrb[0].mxu0
    %v451 = vadd.f32 %v386, %v450
    %v452 = vpop.f32.mrb[0].mxu0
    %v453 = vpop.f32.mrb[0].mxu0
    %v454 = vpop.f32.mrb[0].mxu0
    %455 = vdwg.mxu0
    %v456 = vmax.f32 %v451, 0.0
    %v457 = vpack.c.bf16 %v456, %v456
    %v458 = vld [vmem:[%s5] sm:$0xf]
    %v459 = vld [vmem:[%s5 + $0x4] sm:$0xf]
    %v460 = vld [vmem:[%s5 + $0x8] sm:$0xf]
    %v461 = vld [vmem:[%s5 + $0xc] sm:$0xf]
    %v462 = vld [vmem:[%s5 + $0x10] sm:$0xf]
    %v463 = vld [vmem:[%s5 + $0x14] sm:$0xf]
    %v464 = vld [vmem:[%s5 + $0x18] sm:$0xf]
    %v465 = vld [vmem:[%s5 + $0x1c] sm:$0xf]
    %v466 = vld [vmem:[%s6] sm:$0x1]
    %v468 = vlaneseq
    %v469 = vshrl.u32 %v468, 7
    %v470 = vsub.s32 0, %v469
    %v471 = vrot.slane %v466, %v470
    %v481 = vunpack.c.l.b16 %v458
    %v482 = vunpack.c.l.b16 %v459
    %v483 = vunpack.c.l.b16 %v460
    %v484 = vunpack.c.l.b16 %v461
    %v485 = vunpack.c.l.b16 %v462
    %v486 = vunpack.c.l.b16 %v463
    %v487 = vunpack.c.l.b16 %v464
    %v488 = vunpack.c.l.b16 %v465
    %v489 = vpack.c.b16 %v482, %v481
    %v490 = vpack.c.b16 %v484, %v483
    %v491 = vpack.c.b16 %v486, %v485
    %v492 = vpack.c.b16 %v488, %v487
    %v498 = vsel %vm412, %v457, 0
    %500 = vmatprep.subr.bf16.mxu0 0
    %501 = vmatpush1.bf16.msra.mxu0 %v489
    %502 = vmatprep.subr.bf16.mxu0 0
    %503 = vmatpush1.bf16.msra.mxu0 %v490
    %504 = vmatprep.subr.bf16.mxu0 0
    %505 = vmatpush1.bf16.msra.mxu0 %v491
    %506 = vmatprep.subr.bf16.mxu0 0
    %507 = vmatpush1.bf16.msra.mxu0 %v492
    %508 = vmatprep.subr.bf16.mxu0 0
    %509 = vmatpush1.bf16.msra.mxu0 0
    %510 = vmatprep.subr.bf16.mxu0 0
    %511 = vmatpush1.bf16.msra.mxu0 0
    %512 = vmatprep.subr.bf16.mxu0 0
    %513 = vmatpush1.bf16.msra.mxu0 0
    %514 = vmatprep.subr.bf16.mxu0 0
    %515 = vmatpush1.bf16.msra.mxu0 0
    %516 = vmatprep.subr.bf16.mxu0 0
    %517 = vmatpush1.bf16.msra.mxu0 0
    %518 = vmatprep.subr.bf16.mxu0 0
    %519 = vmatpush1.bf16.msra.mxu0 0
    %520 = vmatprep.subr.bf16.mxu0 0
    %521 = vmatpush1.bf16.msra.mxu0 0
    %522 = vmatprep.subr.bf16.mxu0 0
    %523 = vmatpush1.bf16.msra.mxu0 0
    %524 = vmatprep.subr.bf16.mxu0 0
    %525 = vmatpush1.bf16.msra.mxu0 0
    %526 = vmatprep.subr.bf16.mxu0 0
    %527 = vmatpush1.bf16.msra.mxu0 0
    %528 = vmatprep.subr.bf16.mxu0 0
    %529 = vmatpush1.bf16.msra.mxu0 0
    %530 = vmatprep.subr.bf16.mxu0 0
    %531 = vmatpush1.bf16.msra.mxu0 0
    %532 = vmatprep.mubr.bf16.mxu0 0
    %533 = vmatmul.mubr.bf16.gmra.mrb[0].mxu0 %v498
    %v534 = vpop.f32.mrb[0].mxu0
    %v535 = vadd.f32 %v471, %v534
    %v536 = vpop.f32.mrb[0].mxu0
    %v537 = vpop.f32.mrb[0].mxu0
    %v538 = vpop.f32.mrb[0].mxu0
    %539 = vdwg.mxu0
    %v540 = vpack.c.bf16 %v535, %v535
    %v543 = vunpack.c.l.s4 1966171168
    %v544 = vunpack.c.0.s8 %v543
    %v545 = vlaneseq
    %v546 = vshrl.u32 %v545, 7
    %v547 = vsub.s32 %v544, %v546
    %v548 = vrot.slane %v540, %v547
    %v549 = vcombine.high %v548, %v548
    %v551 = vunpack.c.l.s4 1966171168
    %v552 = vunpack.c.0.s8 %v551
    %v553 = vlaneseq
    %v554 = vshrl.u32 %v553, 7
    %v555 = vsub.s32 %v552, %v554
    %v556 = vrot.slane %v548, %v555
    %v558 = vunpack.c.l.s4 1966171168
    %v559 = vunpack.c.0.s8 %v558
    %v560 = vlaneseq
    %v561 = vshrl.u32 %v560, 7
    %v562 = vsub.s32 %v559, %v561
    %v563 = vrot.slane %v549, %v562
    %v564 = vcombine.high %v556, %v556
    %v565 = vcombine.high %v563, %v563
    %570 = vst [vmem:[#allocation2] sm:$0x1] %v556
    %571 = vst [vmem:[#allocation2 + $0x1] sm:$0x1] %v563
    %572 = vst [vmem:[#allocation2 + $0x2] sm:$0x1] %v564
    %573 = vst [vmem:[#allocation2 + $0x3] sm:$0x1] %v565
    // Predicated region
    $region30: #{tpu_custom_call.1} parent=1 // pred_check
      _
    $region31: #{tpu_custom_call.1} parent=1 // pred_check_branch
      %575 = sbr.rel (0) target = $region33
    $region32: #{tpu_custom_call.1} parent=1 // pred_region
      %s577 = ssub.s32 64, 16
      %578 = vsyncadd [#allocation3], %s577
      %s579 = sshll.u32 [#allocation2], 4
      %s580 = int_to_ptr.vmem [resolvable:$true] %s579
      %585 = dma.vmem_to_hbm [thread:$0]  %s580, 16, %s7, [#allocation3], 16, 16, 1
    $region33: #{tpu_custom_call.1} parent=1 // pred_fallthru
      _
    // Predicated region
    $region34: #{tpu_custom_call.1} parent=1 // pred_check
      _
    $region35: #{tpu_custom_call.1} parent=1 // pred_check_branch
      %587 = sbr.rel (0) target = $region37
    $region36: #{tpu_custom_call.1} parent=1 // pred_region
      %588 = dma.done [#allocation3], 64
    $region37: #{tpu_custom_call.1} parent=1 // pred_fallthru
      _
    %589 = vsyncpa [#allocation3], 1

</llo_original>
